<compile_context>
chip_gen: v6e
topology: v6e:2x2x1
jax: 0.10.0
libtpu: 0.0.40
codegen_flags: <defaults>
</compile_context>

<pallas_src>
import jax
import jax.numpy as jnp
from jax import lax
from jax.experimental import pallas as pl
from jax.experimental.pallas import tpu as pltpu

LANES = 128
SUBLANES = 8


def _make_kernel(tm, blocks_per_split, total_rows, need_mask):
    """Builds the kernel closed over static tiling parameters."""

    def kernel(c_ref, l_ref, w_ref, o_ref):
        j = pl.program_id(1)

        # Zero this split's partial-sum block on its first step.
        @pl.when(j == 0)
        def _():
            o_ref[...] = jnp.zeros_like(o_ref)

        # Upcast in-kernel (no materializing astype copies in the wrapper).
        c = c_ref[...].astype(jnp.float32)
        l = l_ref[...].astype(jnp.float32)
        w = w_ref[...].astype(jnp.float32)

        # sigmoid(c) = 1 / (1 + exp(-c)); exp goes to the EUP slot.
        x = pl.reciprocal(1.0 + jnp.exp(-c), approx=False)
        d = x - l
        y = w * d * d

        if need_mask:
            # Mask rows past the real data (ragged tail / phantom trailing
            # block of an uneven core split).  Mask is based on logical grid
            # position, so clamped/garbage block contents are irrelevant.
            i = pl.program_id(0)
            base = (i * blocks_per_split + j) * tm
            local = lax.broadcasted_iota(jnp.int32, (tm, LANES), 0)
            y = jnp.where(base + local < total_rows, y, 0.0)

        # Fold (tm, 128) -> (8, 128) partials with pure VPU vreg adds; the
        # cross-lane reduction happens once, outside the kernel.
        o_ref[...] += jnp.sum(y.reshape(tm // SUBLANES, SUBLANES, LANES), axis=0)

    return kernel


def weighted_se_loss(classifier, labels, weights, *, tile_m=1024, num_splits=2):
    """Pallas equivalent of WeightedSELoss()(classifier, labels, weights)."""
    assert classifier.shape == labels.shape == weights.shape

    n = int(classifier.size)
    c = classifier.reshape(-1)   # free (contiguous collapse), native dtype
    l = labels.reshape(-1)
    w = weights.reshape(-1)

    # Only pad when the flat length is not a multiple of 128 lanes.  Weights
    # are padded with 0, so the padded tail contributes exactly 0.
    rem = n % LANES
    if rem:
        pad = LANES - rem
        c = jnp.pad(c, (0, pad))
        l = jnp.pad(l, (0, pad))
        w = jnp.pad(w, (0, pad))

    M = c.shape[0] // LANES
    c2 = c.reshape(M, LANES)     # free reshape: lane-dense 2-D slab
    l2 = l.reshape(M, LANES)
    w2 = w.reshape(M, LANES)

    # Row-tile size: large to amortize per-step overhead, clamped for tiny
    # inputs, always a multiple of 8 (sublane tiling).
    tm = max(SUBLANES, min(tile_m, ((M + SUBLANES - 1) // SUBLANES) * SUBLANES))
    nb = pl.cdiv(M, tm)                 # number of real row-blocks
    bps = pl.cdiv(nb, num_splits)       # blocks per split (per TC on v7x)
    need_mask = (num_splits * bps * tm) != M

    def in_map(i, j):
        # Clamp phantom trailing blocks (uneven split) onto the last real
        # block; their contribution is zeroed by the in-kernel row mask.
        return (jnp.minimum(i * bps + j, nb - 1), 0)

    blk = pl.BlockSpec((tm, LANES), in_map)
    out_spec = pl.BlockSpec((None, SUBLANES, LANES), lambda i, j: (i, 0, 0))

    kernel = _make_kernel(tm, bps, M, need_mask)

    bytes_accessed = int(
        c2.size * jnp.dtype(c2.dtype).itemsize
        + l2.size * jnp.dtype(l2.dtype).itemsize
        + w2.size * jnp.dtype(w2.dtype).itemsize
        + num_splits * SUBLANES * LANES * 4
    )
    cost = pl.CostEstimate(flops=7 * n, transcendentals=n,
                           bytes_accessed=bytes_accessed)

    partials = pl.pallas_call(
        kernel,
        out_shape=jax.ShapeDtypeStruct((num_splits, SUBLANES, LANES), jnp.float32),
        grid_spec=pltpu.PrefetchScalarGridSpec(
            num_scalar_prefetch=0,
            grid=(num_splits, bps),
            in_specs=[blk, blk, blk],
            out_specs=out_spec,
        ),
        compiler_params=pltpu.CompilerParams(
            dimension_semantics=("parallel", "arbitrary"),
        ),
        cost_estimate=cost,
    )(c2, l2, w2)

    # Single tiny cross-lane reduction outside the kernel.
    return jnp.sum(partials)


def weighted_se_loss_ref(classifier, labels, weights):
    x = 1.0 / (1.0 + jnp.exp(-classifier.astype(jnp.float32)))
    y = weights.astype(jnp.float32) * (x - labels.astype(jnp.float32)) ** 2
    return jnp.sum(y)


if __name__ == "__main__":
    key = jax.random.PRNGKey(0)
    k1, k2, k3 = jax.random.split(key, 3)

    # Primary small, module-consistent shapes: batch=2, channels=4, spatial=16x16
    shape = (2, 4, 16, 16)
    classifier = jax.random.normal(k1, shape, dtype=jnp.float32)
    labels = (jax.random.uniform(k2, shape) > 0.5).astype(jnp.float32)
    weights = jax.random.uniform(k3, shape, dtype=jnp.float32)

    loss = jax.block_until_ready(weighted_se_loss(classifier, labels, weights))
    ref = weighted_se_loss_ref(classifier, labels, weights)
    assert jnp.allclose(loss, ref, rtol=1e-4, atol=1e-4), (loss, ref)

    # Multi-block / split path (small tile override forces several grid steps).
    shape2 = (2, 4, 64, 64)
    c2 = jax.random.normal(k1, shape2, dtype=jnp.float32)
    l2 = (jax.random.uniform(k2, shape2) > 0.5).astype(jnp.float32)
    w2 = jax.random.uniform(k3, shape2, dtype=jnp.float32)
    loss2 = jax.block_until_ready(weighted_se_loss(c2, l2, w2, tile_m=64))
    ref2 = weighted_se_loss_ref(c2, l2, w2)
    assert jnp.allclose(loss2, ref2, rtol=1e-4, atol=1e-4), (loss2, ref2)

    # Ragged element count (not a multiple of 128) exercises the masked tail.
    shape3 = (3, 5, 7, 11)
    c3 = jax.random.normal(k1, shape3, dtype=jnp.float32)
    l3 = (jax.random.uniform(k2, shape3) > 0.5).astype(jnp.float32)
    w3 = jax.random.uniform(k3, shape3, dtype=jnp.float32)
    loss3 = jax.block_until_ready(weighted_se_loss(c3, l3, w3))
    ref3 = weighted_se_loss_ref(c3, l3, w3)
    assert jnp.allclose(loss3, ref3, rtol=1e-4, atol=1e-4), (loss3, ref3)

    print("KERNEL_OK")
</pallas_src>

<mosaic_0001>
module attributes {stable_mosaic.version = 11 : i64} {
  func.func @kernel(%arg0: i32, %arg1: i32, %arg2: memref<16x128xf32, #tpu.memory_space<vmem>>, %arg3: memref<16x128xf32, #tpu.memory_space<vmem>>, %arg4: memref<16x128xf32, #tpu.memory_space<vmem>>, %arg5: memref<1x8x128xf32, #tpu.memory_space<vmem>>) attributes {dimension_semantics = [#tpu.dimension_semantics<parallel>, #tpu.dimension_semantics<arbitrary>], iteration_bounds = array<i64: 2, 1>, scalar_prefetch = 0 : i64, scratch_operands = 0 : i64, tpu.core_type = #tpu.core_type<tc>, window_params = [{transform_indices = @transform_0, window_bounds = array<i64: 16, 128>}, {transform_indices = @transform_1, window_bounds = array<i64: 16, 128>}, {transform_indices = @transform_2, window_bounds = array<i64: 16, 128>}, {transform_indices = @transform_3, window_bounds = array<i64: 1, 8, 128>}]} {
    %c0_i32 = arith.constant 0 : i32
    %0 = arith.cmpi eq, %arg1, %c0_i32 : i32
    %1 = arith.extui %0 : i1 to i32
    %c0_i32_0 = arith.constant 0 : i32
    %2 = arith.cmpi ne, %1, %c0_i32_0 : i32
    scf.if %2 {
      %cst_16 = arith.constant 0.000000e+00 : f32
      %33 = vector.broadcast %cst_16 : f32 to vector<8x128xf32>
      %c0_17 = arith.constant 0 : index
      %c0_18 = arith.constant 0 : index
      %c0_19 = arith.constant 0 : index
      %34 = vector.load %arg5[%c0_17, %c0_18, %c0_19] : memref<1x8x128xf32, #tpu.memory_space<vmem>>, vector<1x8x128xf32>
      %35 = vector.shape_cast %34 : vector<1x8x128xf32> to vector<8x128xf32>
      %36 = vector.shape_cast %33 : vector<8x128xf32> to vector<1x8x128xf32>
      tpu.vector_store %arg5[%c0_17, %c0_18, %c0_19], %36 {strides = array<i32>} : memref<1x8x128xf32, #tpu.memory_space<vmem>>, vector<1x8x128xf32>,
    } else {
    }
    %c0 = arith.constant 0 : index
    %c0_1 = arith.constant 0 : index
    %3 = vector.load %arg2[%c0, %c0_1] : memref<16x128xf32, #tpu.memory_space<vmem>>, vector<16x128xf32>
    %c0_2 = arith.constant 0 : index
    %c0_3 = arith.constant 0 : index
    %4 = vector.load %arg3[%c0_2, %c0_3] : memref<16x128xf32, #tpu.memory_space<vmem>>, vector<16x128xf32>
    %c0_4 = arith.constant 0 : index
    %c0_5 = arith.constant 0 : index
    %5 = vector.load %arg4[%c0_4, %c0_5] : memref<16x128xf32, #tpu.memory_space<vmem>>, vector<16x128xf32>
    %cst = arith.constant 0.000000e+00 : f32
    %6 = vector.broadcast %cst : f32 to vector<16x128xf32>
    %7 = arith.subf %6, %3 : vector<16x128xf32>
    %8 = math.exp %7 : vector<16x128xf32>
    %cst_6 = arith.constant 1.000000e+00 : f32
    %9 = vector.broadcast %cst_6 : f32 to vector<16x128xf32>
    %10 = arith.addf %9, %8 : vector<16x128xf32>
    %11 = tpu.reciprocal %10 : vector<16x128xf32> -> vector<16x128xf32>
    %12 = arith.subf %11, %4 : vector<16x128xf32>
    %13 = arith.mulf %5, %12 : vector<16x128xf32>
    %14 = arith.mulf %13, %12 : vector<16x128xf32>
    %c1_i32 = arith.constant 1 : i32
    %15 = arith.muli %arg0, %c1_i32 : i32
    %16 = arith.addi %15, %arg1 : i32
    %c16_i32 = arith.constant 16 : i32
    %17 = arith.muli %16, %c16_i32 : i32
    %18 = tpu.iota {dimensions = array<i32: 0>} : vector<16x128xi32>
    %19 = vector.broadcast %17 : i32 to vector<16x128xi32>
    %20 = arith.addi %19, %18 : vector<16x128xi32>
    %c16_i32_7 = arith.constant 16 : i32
    %21 = vector.broadcast %c16_i32_7 : i32 to vector<16x128xi32>
    %22 = arith.cmpi slt, %20, %21 : vector<16x128xi32>
    %cst_8 = arith.constant 0.000000e+00 : f32
    %23 = vector.broadcast %cst_8 : f32 to vector<16x128xf32>
    %24 = arith.select %22, %14, %23 : vector<16x128xi1>, vector<16x128xf32>
    %c0_9 = arith.constant 0 : index
    %c0_10 = arith.constant 0 : index
    %c0_11 = arith.constant 0 : index
    %25 = vector.load %arg5[%c0_9, %c0_10, %c0_11] : memref<1x8x128xf32, #tpu.memory_space<vmem>>, vector<1x8x128xf32>
    %26 = vector.shape_cast %25 : vector<1x8x128xf32> to vector<8x128xf32>
    %27 = vector.shape_cast %24 : vector<16x128xf32> to vector<2x8x128xf32>
    %cst_12 = arith.constant dense<0.000000e+00> : vector<8x128xf32>
    %28 = vector.multi_reduction <add>, %27, %cst_12 [0] : vector<2x8x128xf32> to vector<8x128xf32>
    %29 = arith.addf %26, %28 : vector<8x128xf32>
    %c0_13 = arith.constant 0 : index
    %c0_14 = arith.constant 0 : index
    %c0_15 = arith.constant 0 : index
    %30 = vector.load %arg5[%c0_13, %c0_14, %c0_15] : memref<1x8x128xf32, #tpu.memory_space<vmem>>, vector<1x8x128xf32>
    %31 = vector.shape_cast %30 : vector<1x8x128xf32> to vector<8x128xf32>
    %32 = vector.shape_cast %29 : vector<8x128xf32> to vector<1x8x128xf32>
    tpu.vector_store %arg5[%c0_13, %c0_14, %c0_15], %32 {strides = array<i32>} : memref<1x8x128xf32, #tpu.memory_space<vmem>>, vector<1x8x128xf32>,
    return
  }
  func.func @transform_0(%arg0: i32, %arg1: i32) -> (i32, i32) {
    %c1_i32 = arith.constant 1 : i32
    %0 = arith.muli %arg0, %c1_i32 : i32
    %1 = arith.addi %0, %arg1 : i32
    %c0_i32 = arith.constant 0 : i32
    %2 = arith.minsi %1, %c0_i32 : i32
    %c0_i32_0 = arith.constant 0 : i32
    %c0_i32_1 = arith.constant 0 : i32
    return %2, %c0_i32_0 : i32, i32
  }
  func.func @transform_1(%arg0: i32, %arg1: i32) -> (i32, i32) {
    %c1_i32 = arith.constant 1 : i32
    %0 = arith.muli %arg0, %c1_i32 : i32
    %1 = arith.addi %0, %arg1 : i32
    %c0_i32 = arith.constant 0 : i32
    %2 = arith.minsi %1, %c0_i32 : i32
    %c0_i32_0 = arith.constant 0 : i32
    %c0_i32_1 = arith.constant 0 : i32
    return %2, %c0_i32_0 : i32, i32
  }
  func.func @transform_2(%arg0: i32, %arg1: i32) -> (i32, i32) {
    %c1_i32 = arith.constant 1 : i32
    %0 = arith.muli %arg0, %c1_i32 : i32
    %1 = arith.addi %0, %arg1 : i32
    %c0_i32 = arith.constant 0 : i32
    %2 = arith.minsi %1, %c0_i32 : i32
    %c0_i32_0 = arith.constant 0 : i32
    %c0_i32_1 = arith.constant 0 : i32
    return %2, %c0_i32_0 : i32, i32
  }
  func.func @transform_3(%arg0: i32, %arg1: i32) -> (i32, i32, i32) {
    %c0_i32 = arith.constant 0 : i32
    %c0_i32_0 = arith.constant 0 : i32
    %c0_i32_1 = arith.constant 0 : i32
    return %arg0, %c0_i32, %c0_i32_0 : i32, i32, i32
  }
}

</mosaic_0001>

<llo_original>
// kernel: tpu_custom_call.1
$region0: #{tpu_custom_call.1}
  #allocation0 [shape = 'u32[]', space=smem, size = 0x4, offset = 0x4, fixed_abs, tag = 'smem constant byte address 0x4 - core index']
  #allocation1 [shape = 'u32[144,128]{1,0:T(1,128)}', space=vmem, size = 0x12000, scoped, tag = 'internal scratch']
  %s0 = inlined_call_operand.hbm [shape: f32[16,128], index: 0, kind: input, shape index: {}]
  %s1 = inlined_call_operand.hbm [shape: f32[16,128], index: 1, kind: input, shape index: {}]
  %s2 = inlined_call_operand.hbm [shape: f32[16,128], index: 2, kind: input, shape index: {}]
  %s3 = inlined_call_operand.hbm [shape: f32[2,8,128], index: 3, kind: output, shape index: {}]
  %s4 = sld [smem:[#allocation0]]
  $region61: #{tpu_custom_call.1} parent=0
    _
  %s6 = ssub.s32 1, %s4
  %s7 = scalar_select 0, %s6, %s4
  $region1: #{tpu_custom_call.1} parent=0
    #allocation2 [shape = 'u8[16384]{0}', space=vmem, size = 0x4000, scoped, tag = 'input window, operand 0']
    #allocation3 [shape = 's32[2]{0}', space=sflag, size = 0x8, scoped, tag = 'scoped memory for tpu_custom_call.1']
    #allocation4 [shape = 's32[2]{0}', space=sflag, size = 0x8, scoped, tag = 'scoped memory for tpu_custom_call.1']
    #allocation5 [shape = 'u8[16384]{0}', space=vmem, size = 0x4000, scoped, tag = 'input window, operand 1']
    #allocation6 [shape = 's32[2]{0}', space=sflag, size = 0x8, scoped, tag = 'scoped memory for tpu_custom_call.1']
    #allocation7 [shape = 'u8[16384]{0}', space=vmem, size = 0x4000, scoped, tag = 'input window, operand 2']
    #allocation8 [shape = 'u8[8192]{0}', space=vmem, size = 0x2000, scoped, tag = 'output window, operand 0']
    %8 = vsyncpa [#allocation3], 0
    %s9 = scalar_lea.sflag [#allocation3], 1
    %10 = vsyncpa %s9, 0
    %11 = vsyncpa [#allocation6], 0
    %s12 = scalar_lea.sflag [#allocation6], 1
    %13 = vsyncpa %s12, 0
    %14 = vsyncpa [#allocation4], 0
    %s15 = scalar_lea.sflag [#allocation4], 1
    %16 = vsyncpa %s15, 0
    loop: start=0, step=1, limit=4
    $region2: #{tpu_custom_call.1} parent=1 // loop_pre_header
      _
    $region3: #{tpu_custom_call.1} parent=1 // loop_header
      %s18 = sphi 0, %s22
      %p19 = scmp.ge.s32.totalorder %s18, 4
      %s25 = sphi 0, %s37
      %s26 = sphi 0, %s33
      %s27 = sphi 0, %s25
      %s28 = sphi 0, %s26
      %s29 = sphi 0, %s27
      %s30 = sphi 0, %s28
      %s46 = sphi 0, %s48
      %s49 = sphi 0, %s46
      %s50 = sphi 0, %s49
      %s66 = sphi 0, %s50
      %s78 = sphi 0, %s80
      %s81 = sphi 0, %s78
      %s82 = sphi 0, %s81
      %s98 = sphi 0, %s82
      %s110 = sphi 0, %s112
      %s113 = sphi 0, %s110
      %s114 = sphi 0, %s113
      %s130 = sphi 0, %s114
      %s136 = sphi 0, %s138
      %s139 = sphi 0, %s136
      %s140 = sphi 0, %s139
      %s156 = sphi 0, %s140
    $region4: #{tpu_custom_call.1} parent=1 // loop_header_branch
      %21 = sbr.rel (%p19) target = $region8
    $region5: #{tpu_custom_call.1} parent=1 // loop_body
      %s23 = ssub.s32 %s18, 1
      %s24 = ssub.s32 %s18, 2
      %s31 = sadd.s32 1, %s26
      %p32 = scmp.ge.s32.totalorder %s31, 1
      %s33 = scalar_select %p32, 0, %s31
      %s34 = sadd.s32 1, %s25
      %s35 = scalar_select %p32, %s34, %s25
      %p36 = scmp.ge.s32.totalorder %s35, 2
      %s37 = scalar_select %p36, 0, %s35
      %s38 = sadd.s32 %s25, %s26
      %p39 = scmp.lt.s32.totalorder %s38, 0
      %s40 = scalar_select %p39, %s38, 0
      %s41 = sadd.s32 %s37, %s33
      %p42 = scmp.lt.s32.totalorder %s41, 0
      %s43 = scalar_select %p42, %s41, 0
      %s44 = ssub.s32 %s40, %s43
      %p45 = scmp.eq.s32.totalorder %s44, 0
      %s47 = sadd.s32 %s46, 1
      %s48 = scalar_select %p45, %s46, %s47
      %p51 = pneg %p45
      %p52 = scmp.eq.s32.totalorder %s18, 1
      %p53 = por %p51, %p52
      %p54 = scmp.ne.s32.totalorder %s46, %s49
      %p55 = scmp.eq.s32.totalorder %s18, 0
      %p56 = por %p54, %p55
      %p57 = scmp.ne.s32.totalorder %s46, %s49
      %p58 = scmp.eq.s32.totalorder %s23, 1
      %p59 = por %p57, %p58
      %p60 = scmp.ne.s32.totalorder %s49, %s50
      %p61 = scmp.eq.s32.totalorder %s23, 0
      %p62 = por %p60, %p61
      %p63 = scmp.ne.s32.totalorder %s49, %s50
      %p64 = scmp.eq.s32.totalorder %s24, 1
      %p65 = por %p63, %p64
      %p67 = scmp.ne.s32.totalorder %s50, %s66
      %p68 = scmp.eq.s32.totalorder %s24, 0
      %p69 = por %p67, %p68
      %s70 = sadd.s32 %s25, %s26
      %p71 = scmp.lt.s32.totalorder %s70, 0
      %s72 = scalar_select %p71, %s70, 0
      %s73 = sadd.s32 %s37, %s33
      %p74 = scmp.lt.s32.totalorder %s73, 0
      %s75 = scalar_select %p74, %s73, 0
      %s76 = ssub.s32 %s72, %s75
      %p77 = scmp.eq.s32.totalorder %s76, 0
      %s79 = sadd.s32 %s78, 1
      %s80 = scalar_select %p77, %s78, %s79
      %p83 = pneg %p77
      %p84 = scmp.eq.s32.totalorder %s18, 1
      %p85 = por %p83, %p84
      %p86 = scmp.ne.s32.totalorder %s78, %s81
      %p87 = scmp.eq.s32.totalorder %s18, 0
      %p88 = por %p86, %p87
      %p89 = scmp.ne.s32.totalorder %s78, %s81
      %p90 = scmp.eq.s32.totalorder %s23, 1
      %p91 = por %p89, %p90
      %p92 = scmp.ne.s32.totalorder %s81, %s82
      %p93 = scmp.eq.s32.totalorder %s23, 0
      %p94 = por %p92, %p93
      %p95 = scmp.ne.s32.totalorder %s81, %s82
      %p96 = scmp.eq.s32.totalorder %s24, 1
      %p97 = por %p95, %p96
      %p99 = scmp.ne.s32.totalorder %s82, %s98
      %p100 = scmp.eq.s32.totalorder %s24, 0
      %p101 = por %p99, %p100
      %s102 = sadd.s32 %s25, %s26
      %p103 = scmp.lt.s32.totalorder %s102, 0
      %s104 = scalar_select %p103, %s102, 0
      %s105 = sadd.s32 %s37, %s33
      %p106 = scmp.lt.s32.totalorder %s105, 0
      %s107 = scalar_select %p106, %s105, 0
      %s108 = ssub.s32 %s104, %s107
      %p109 = scmp.eq.s32.totalorder %s108, 0
      %s111 = sadd.s32 %s110, 1
      %s112 = scalar_select %p109, %s110, %s111
      %p115 = pneg %p109
      %p116 = scmp.eq.s32.totalorder %s18, 1
      %p117 = por %p115, %p116
      %p118 = scmp.ne.s32.totalorder %s110, %s113
      %p119 = scmp.eq.s32.totalorder %s18, 0
      %p120 = por %p118, %p119
      %p121 = scmp.ne.s32.totalorder %s110, %s113
      %p122 = scmp.eq.s32.totalorder %s23, 1
      %p123 = por %p121, %p122
      %p124 = scmp.ne.s32.totalorder %s113, %s114
      %p125 = scmp.eq.s32.totalorder %s23, 0
      %p126 = por %p124, %p125
      %p127 = scmp.ne.s32.totalorder %s113, %s114
      %p128 = scmp.eq.s32.totalorder %s24, 1
      %p129 = por %p127, %p128
      %p131 = scmp.ne.s32.totalorder %s114, %s130
      %p132 = scmp.eq.s32.totalorder %s24, 0
      %p133 = por %p131, %p132
      %s134 = ssub.s32 %s25, %s37
      %p135 = scmp.eq.s32.totalorder %s134, 0
      %s137 = sadd.s32 %s136, 1
      %s138 = scalar_select %p135, %s136, %s137
      %p141 = pneg %p135
      %p142 = scmp.eq.s32.totalorder %s18, 1
      %p143 = por %p141, %p142
      %p144 = scmp.ne.s32.totalorder %s136, %s139
      %p145 = scmp.eq.s32.totalorder %s18, 0
      %p146 = por %p144, %p145
      %p147 = scmp.ne.s32.totalorder %s136, %s139
      %p148 = scmp.eq.s32.totalorder %s23, 1
      %p149 = por %p147, %p148
      %p150 = scmp.ne.s32.totalorder %s139, %s140
      %p151 = scmp.eq.s32.totalorder %s23, 0
      %p152 = por %p150, %p151
      %p153 = scmp.ne.s32.totalorder %s139, %s140
      %p154 = scmp.eq.s32.totalorder %s24, 1
      %p155 = por %p153, %p154
      %p157 = scmp.ne.s32.totalorder %s140, %s156
      %p158 = scmp.eq.s32.totalorder %s24, 0
      %p159 = por %p157, %p158
      %p160 = scmp.le.s32.totalorder 1, %s18
      %p161 = scmp.lt.s32.totalorder %s18, 3
      %p162 = pnand %p160, %p161
      %p163 = pneg %p162
      // Predicated region
      $region9: #{tpu_custom_call.1} parent=5 // pred_check
        _
      $region10: #{tpu_custom_call.1} parent=5 // pred_check_branch
        %165 = sbr.rel (%p162) target = $region12
      $region11: #{tpu_custom_call.1} parent=5 // pred_region
        %s166 = ssub.s32 %s18, 1
      $region12: #{tpu_custom_call.1} parent=5 // pred_fallthru
        _
      %p167 = scmp.lt.s32.totalorder %s18, 2
      // Predicated region
      $region13: #{tpu_custom_call.1} parent=5 // pred_check
        %p168 = pneg %p167
      $region14: #{tpu_custom_call.1} parent=5 // pred_check_branch
        %170 = sbr.rel (%p168) target = $region16
      $region15: #{tpu_custom_call.1} parent=5 // pred_region
        // Predicated region
        $region17: #{tpu_custom_call.1} parent=15 // pred_check
          %p171 = pneg %p56
        $region18: #{tpu_custom_call.1} parent=15 // pred_check_branch
          %173 = sbr.rel (%p171) target = $region20
        $region19: #{tpu_custom_call.1} parent=15 // pred_region
          %s174 = sand.u32 %s46, 1
          %s175 = scalar_lea.sflag [#allocation3], %s174
          %s176 = sand.u32 %s46, 1
          %s177 = smul.addr %s176, 16
          %s178 = scalar_lea.vmem [#allocation2], %s177
          %s179 = sadd.s32 %s25, %s26
          %p180 = scmp.lt.s32.totalorder %s179, 0
          %s181 = scalar_select %p180, %s179, 0
          %s182 = smul.u32 2, %s181
          %s184 = ssub.s32 256, 256
          %185 = vsyncadd %s175, %s184
          %s186 = smul.addr %s182, 128
          %s187 = scalar_lea.hbm %s0, %s186
          %s188 = sshll.u32 %s178, 4
          %s189 = int_to_ptr.vmem [resolvable:$true] %s188
          %194 = dma.hbm_to_vmem [thread:$0]  %s187, 256, %s189, %s175, 128, 128, 8
        $region20: #{tpu_custom_call.1} parent=15 // pred_fallthru
          _
        // Predicated region
        $region21: #{tpu_custom_call.1} parent=15 // pred_check
          %p195 = pneg %p88
        $region22: #{tpu_custom_call.1} parent=15 // pred_check_branch
          %197 = sbr.rel (%p195) target = $region24
        $region23: #{tpu_custom_call.1} parent=15 // pred_region
          %s198 = sand.u32 %s18, 1
          %s199 = scalar_lea.sflag [#allocation6], %s198
          %s200 = sand.u32 %s78, 1
          %s201 = smul.addr %s200, 16
          %s202 = scalar_lea.vmem [#allocation5], %s201
          %s203 = sadd.s32 %s25, %s26
          %p204 = scmp.lt.s32.totalorder %s203, 0
          %s205 = scalar_select %p204, %s203, 0
          %s206 = smul.u32 2, %s205
          %s208 = ssub.s32 256, 256
          %209 = vsyncadd %s199, %s208
          %s210 = smul.addr %s206, 128
          %s211 = scalar_lea.hbm %s1, %s210
          %s212 = sshll.u32 %s202, 4
          %s213 = int_to_ptr.vmem [resolvable:$true] %s212
          %218 = dma.hbm_to_vmem [thread:$0]  %s211, 256, %s213, %s199, 128, 128, 8
        $region24: #{tpu_custom_call.1} parent=15 // pred_fallthru
          _
        // Predicated region
        $region25: #{tpu_custom_call.1} parent=15 // pred_check
          %p219 = pneg %p120
        $region26: #{tpu_custom_call.1} parent=15 // pred_check_branch
          %221 = sbr.rel (%p219) target = $region28
        $region27: #{tpu_custom_call.1} parent=15 // pred_region
          %s222 = sand.u32 %s18, 1
          %s223 = scalar_lea.sflag [#allocation6], %s222
          %s224 = sand.u32 %s110, 1
          %s225 = smul.addr %s224, 16
          %s226 = scalar_lea.vmem [#allocation7], %s225
          %s227 = sadd.s32 %s25, %s26
          %p228 = scmp.lt.s32.totalorder %s227, 0
          %s229 = scalar_select %p228, %s227, 0
          %s230 = smul.u32 2, %s229
          %s232 = ssub.s32 256, 256
          %233 = vsyncadd %s223, %s232
          %s234 = smul.addr %s230, 128
          %s235 = scalar_lea.hbm %s2, %s234
          %s236 = sshll.u32 %s226, 4
          %s237 = int_to_ptr.vmem [resolvable:$true] %s236
          %242 = dma.hbm_to_vmem [thread:$0]  %s235, 256, %s237, %s223, 128, 128, 8
        $region28: #{tpu_custom_call.1} parent=15 // pred_fallthru
          _
      $region16: #{tpu_custom_call.1} parent=5 // pred_fallthru
        _
      %p243 = scmp.le.s32.totalorder 1, %s18
      %p244 = scmp.lt.s32.totalorder %s18, 3
      %p245 = pnand %p243, %p244
      %p246 = pneg %p245
      // Predicated region
      $region29: #{tpu_custom_call.1} parent=5 // pred_check
        _
      $region30: #{tpu_custom_call.1} parent=5 // pred_check_branch
        %248 = sbr.rel (%p245) target = $region32
      $region31: #{tpu_custom_call.1} parent=5 // pred_region
        %s249 = ssub.s32 %s18, 1
        %s250 = sand.u32 %s49, 1
        %s251 = scalar_lea.sflag [#allocation3], %s250
        %s252 = sand.u32 %s49, 1
        %s253 = smul.addr %s252, 16
        %s254 = scalar_lea.vmem [#allocation2], %s253
        // Predicated region
        $region33: #{tpu_custom_call.1} parent=31 // pred_check
          %p255 = pneg %p62
        $region34: #{tpu_custom_call.1} parent=31 // pred_check_branch
          %257 = sbr.rel (%p255) target = $region36
        $region35: #{tpu_custom_call.1} parent=31 // pred_region
          %258 = dma.done %s251, 256
        $region36: #{tpu_custom_call.1} parent=31 // pred_fallthru
          _
        %s259 = sand.u32 %s23, 1
        %s260 = scalar_lea.sflag [#allocation6], %s259
        %s261 = sand.u32 %s81, 1
        %s262 = smul.addr %s261, 16
        %s263 = scalar_lea.vmem [#allocation5], %s262
        // Predicated region
        $region37: #{tpu_custom_call.1} parent=31 // pred_check
          %p264 = pneg %p94
        $region38: #{tpu_custom_call.1} parent=31 // pred_check_branch
          %266 = sbr.rel (%p264) target = $region40
        $region39: #{tpu_custom_call.1} parent=31 // pred_region
          %267 = dma.done %s260, 256
        $region40: #{tpu_custom_call.1} parent=31 // pred_fallthru
          _
        %s268 = sand.u32 %s23, 1
        %s269 = scalar_lea.sflag [#allocation6], %s268
        %s270 = sand.u32 %s113, 1
        %s271 = smul.addr %s270, 16
        %s272 = scalar_lea.vmem [#allocation7], %s271
        // Predicated region
        $region41: #{tpu_custom_call.1} parent=31 // pred_check
          %p273 = pneg %p126
        $region42: #{tpu_custom_call.1} parent=31 // pred_check_branch
          %275 = sbr.rel (%p273) target = $region44
        $region43: #{tpu_custom_call.1} parent=31 // pred_region
          %276 = dma.done %s269, 256
        $region44: #{tpu_custom_call.1} parent=31 // pred_fallthru
          _
        %s277 = sand.u32 %s49, 1
        %s278 = scalar_lea.sflag [#allocation3], %s277
        %s279 = sand.u32 %s49, 1
        %s280 = smul.addr %s279, 16
        %s281 = scalar_lea.vmem [#allocation2], %s280
        %p282 = pneg %p62
        %p283 = pneg %p59
        %s284 = sand.u32 %s23, 1
        %s285 = scalar_lea.sflag [#allocation6], %s284
        %s286 = sand.u32 %s81, 1
        %s287 = smul.addr %s286, 16
        %s288 = scalar_lea.vmem [#allocation5], %s287
        %p289 = pneg %p94
        %p290 = pneg %p91
        %s291 = sand.u32 %s23, 1
        %s292 = scalar_lea.sflag [#allocation6], %s291
        %s293 = sand.u32 %s113, 1
        %s294 = smul.addr %s293, 16
        %s295 = scalar_lea.vmem [#allocation7], %s294
        %p296 = pneg %p126
        %p297 = pneg %p123
        %p298 = pneg %p152
        %p299 = pneg %p149
        %s300 = sand.u32 %s139, 1
        %s301 = scalar_lea.sflag [#allocation4], %s300
        %s302 = sand.u32 %s139, 1
        %s303 = smul.addr %s302, 8
        %s304 = scalar_lea.vmem [#allocation8], %s303
        %s305 = sadd.s32 %s27, %s28
        %p306 = scmp.lt.s32.totalorder %s305, 0
        %s307 = scalar_select %p306, %s305, 0
        %s308 = smul.u32 2, %s307
        %s309 = sadd.s32 %s27, %s28
        %p310 = scmp.lt.s32.totalorder %s309, 0
        %s311 = scalar_select %p310, %s309, 0
        %s312 = smul.u32 2, %s311
        %s313 = sadd.s32 %s27, %s28
        %p314 = scmp.lt.s32.totalorder %s313, 0
        %s315 = scalar_select %p314, %s313, 0
        %s316 = smul.u32 2, %s315
        %p317 = scmp.eq.s32.totalorder %s28, 0
        // Predicated region
        $region45: #{tpu_custom_call.1} parent=31 // pred_check
          %p318 = pneg %p317
        $region46: #{tpu_custom_call.1} parent=31 // pred_check_branch
          %320 = sbr.rel (%p318) target = $region48
        $region47: #{tpu_custom_call.1} parent=31 // pred_region
          %321 = vst [vmem:[%s304] sm:$0xff] 0.0
        $region48: #{tpu_custom_call.1} parent=31 // pred_fallthru
          _
        %v322 = vld [vmem:[%s254] sm:$0xff]
        %v323 = vld [vmem:[%s254 + $0x8] sm:$0xff]
        %v324 = vld [vmem:[%s263] sm:$0xff]
        %v325 = vld [vmem:[%s263 + $0x8] sm:$0xff]
        %v326 = vld [vmem:[%s272] sm:$0xff]
        %v327 = vld [vmem:[%s272 + $0x8] sm:$0xff]
        %v328 = vsub.f32 0.0, %v322
        %v329 = vsub.f32 0.0, %v323
        %v330 = vmul.f32 %v328, 1.442695
        %v331 = vpow.pop %v330
        %v332 = vmul.f32 %v329, 1.442695
        %v333 = vpow.pop %v332
        %v334 = vadd.f32 %v331, 1.0
        %v335 = vadd.f32 %v333, 1.0
        %v336 = vrcp.pop %v334
        %v337 = vrcp.pop %v335
        %v338 = vsub.f32 %v336, %v324
        %v339 = vsub.f32 %v337, %v325
        %v340 = vmul.f32 %v326, %v338
        %v341 = vmul.f32 %v327, %v339
        %v342 = vmul.f32 %v340, %v338
        %v343 = vmul.f32 %v341, %v339
        %s344 = sadd.s32 %s27, %s28
        %s345 = smul.u32 %s344, 16
        %v346 = vlaneseq
        %v347 = vshrl.u32 %v346, 7
        %v348 = vadd.s32 %v347, 8
        %v349 = vstv %s345
        %v350 = vadd.s32 %v349, %v347
        %v351 = vadd.s32 %v349, %v348
        %vm352 = vcmp.lt.s32.totalorder %v350, 16
        %vm353 = vcmp.lt.s32.totalorder %v351, 16
        %v354 = vsel %vm352, %v342, 0.0
        %v355 = vsel %vm353, %v343, 0.0
        %v356 = vld [vmem:[%s304] sm:$0xff]
        %v357 = vadd.f32 %v354, %v355
        %v358 = vadd.f32 %v356, %v357
        %359 = vst [vmem:[%s304] sm:$0xff] %v358
        %s360 = sand.u32 %s139, 1
        %s361 = scalar_lea.sflag [#allocation4], %s360
        %s362 = sand.u32 %s139, 1
        %s363 = smul.addr %s362, 8
        %s364 = scalar_lea.vmem [#allocation8], %s363
        // Predicated region
        $region49: #{tpu_custom_call.1} parent=31 // pred_check
          %p365 = pneg %p149
        $region50: #{tpu_custom_call.1} parent=31 // pred_check_branch
          %367 = sbr.rel (%p365) target = $region52
        $region51: #{tpu_custom_call.1} parent=31 // pred_region
          %s369 = ssub.s32 128, 128
          %370 = vsyncadd %s361, %s369
          %s371 = smul.addr %s27, 128
          %s372 = scalar_lea.hbm %s3, %s371
          %s374 = sshll.u32 %s364, 4
          %s375 = int_to_ptr.vmem [resolvable:$true] %s374
          %377 = dma.vmem_to_hbm [thread:$0]  %s375, 128, %s372, %s361
        $region52: #{tpu_custom_call.1} parent=31 // pred_fallthru
          _
      $region32: #{tpu_custom_call.1} parent=5 // pred_fallthru
        _
      %p378 = scmp.le.s32.totalorder 2, %s18
      // Predicated region
      $region53: #{tpu_custom_call.1} parent=5 // pred_check
        %p379 = pneg %p378
      $region54: #{tpu_custom_call.1} parent=5 // pred_check_branch
        %381 = sbr.rel (%p379) target = $region56
      $region55: #{tpu_custom_call.1} parent=5 // pred_region
        %s382 = ssub.s32 %s18, 2
        // Predicated region
        $region57: #{tpu_custom_call.1} parent=55 // pred_check
          %p383 = pneg %p155
        $region58: #{tpu_custom_call.1} parent=55 // pred_check_branch
          %385 = sbr.rel (%p383) target = $region60
        $region59: #{tpu_custom_call.1} parent=55 // pred_region
          %s386 = sand.u32 %s140, 1
          %s387 = scalar_lea.sflag [#allocation4], %s386
          %s388 = sand.u32 %s140, 1
          %s389 = smul.addr %s388, 8
          %s390 = scalar_lea.vmem [#allocation8], %s389
          %391 = dma.done %s387, 128
        $region60: #{tpu_custom_call.1} parent=55 // pred_fallthru
          _
      $region56: #{tpu_custom_call.1} parent=5 // pred_fallthru
        _
    $region6: #{tpu_custom_call.1} parent=1 // loop_footer
      %s22 = sadd.s32 1, %s18
    $region7: #{tpu_custom_call.1} parent=1 // loop_footer_branch
      %17 = sbr.rel target = $region3
    $region8: #{tpu_custom_call.1} parent=1 // loop_exit
      _
    %392 = vsyncpa [#allocation3], 1
    %s393 = scalar_lea.sflag [#allocation3], 1
    %394 = vsyncpa %s393, 1
    %395 = vsyncpa [#allocation6], 1
    %s396 = scalar_lea.sflag [#allocation6], 1
    %397 = vsyncpa %s396, 1
    %398 = vsyncpa [#allocation4], 1
    %s399 = scalar_lea.sflag [#allocation4], 1
    %400 = vsyncpa %s399, 1

</llo_original>
